<compile_context>
chip_gen: v7x
topology: tpu7x:2x2x1
jax: 0.10.0
libtpu: 0.0.40
codegen_flags: <defaults>
</compile_context>

<pallas_src>
import math

import jax
import jax.numpy as jnp
import numpy as np
from jax.experimental import pallas as pl
from jax.experimental.pallas import tpu as pltpu


def _round_up(x, m):
    return (x + m - 1) // m * m


def _pick_pack_factor(c, out, max_p=64, max_weight_bytes=4 << 20):
    """Smallest row->lane packing factor P making P*c and P*out multiples of 128."""
    p1 = 128 // math.gcd(c, 128)
    p2 = 128 // math.gcd(out, 128)
    p = p1 * p2 // math.gcd(p1, p2)  # lcm
    p = max(1, min(p, max_p))
    while p > 1 and (p * c) * (p * out) * 4 > max_weight_bytes:
        p //= 2
    return p


def _choose_tile_pm(m_packed, target_pm):
    """Packed-row tile: large (amortize ~0.35us/step overhead) but capped so the
    1-D grid keeps >= ~4 blocks for megacore sharding on v7x."""
    if m_packed <= 16:
        return m_packed  # one full-extent block (allowed by the (8,128) rule)
    cap = max(16, _round_up((m_packed + 3) // 4, 16))
    tile = max(16, min(target_pm, cap))
    return (tile // 16) * 16


def _vmem_limit_bytes():
    cap = 64 * 1024 * 1024  # conservative fallback = v7x physical VMEM
    try:
        info = pltpu.get_tpu_info()
        cap = int(getattr(info, "vmem_capacity_bytes", cap))
    except Exception:
        pass
    # Leave headroom below physical VMEM: ~48 MiB on v7x (64 MiB), 96 MiB on v5e/v6e.
    return int(min(cap * 3 // 4, 96 * 1024 * 1024))


# ----------------------------- Pallas kernel --------------------------------
def _fused_dense_relu_kernel(x_ref, w_ref, b_ref, o_ref):
    # x_ref: (TILE_PM, P*C)      lane-packed input tile (f32 or bf16)
    # w_ref: (P*C, P*OUT)        P-replicated block-diagonal weight (x dtype)
    # b_ref: (1, P*OUT)          P-tiled bias, f32, VMEM-resident
    # o_ref: (TILE_PM, P*OUT)    lane-dense output slab (multiple of 128 lanes)
    acc = jnp.dot(x_ref[...], w_ref[...], preferred_element_type=jnp.float32)
    acc = acc + b_ref[...]                       # f32 epilogue (v5e has no bf16 VPU)
    o_ref[...] = jnp.maximum(acc, 0.0).astype(o_ref.dtype)


def fused_dense_relu_pallas(x_packed, w, b2d, *, out_dtype, tile_pm=2048):
    """relu(x_packed @ w + b) over a 1-D packed-row grid.

    x_packed: (M_packed, P*C), w: (P*C, P*OUT), b2d: (1, P*OUT).
    """
    mp, pc = x_packed.shape
    pc_w, pout = w.shape
    assert pc == pc_w and b2d.shape == (1, pout)

    tile_pm = _choose_tile_pm(mp, tile_pm)
    grid = (pl.cdiv(mp, tile_pm),)               # ragged last block masked by Pallas

    in_bytes = mp * pc * np.dtype(x_packed.dtype).itemsize
    out_bytes = mp * pout * np.dtype(out_dtype).itemsize
    w_bytes = pc * pout * np.dtype(w.dtype).itemsize + pout * 4
    cost = pl.CostEstimate(
        flops=2 * mp * pc * pout,
        transcendentals=0,
        bytes_accessed=in_bytes + out_bytes + w_bytes,
    )

    return pl.pallas_call(
        _fused_dense_relu_kernel,
        out_shape=jax.ShapeDtypeStruct((mp, pout), out_dtype),
        grid=grid,
        in_specs=[
            pl.BlockSpec((tile_pm, pc), lambda i: (i, 0)),   # x tile, pipelined
            pl.BlockSpec((pc, pout), lambda i: (0, 0)),      # weights, VMEM-resident
            pl.BlockSpec((1, pout), lambda i: (0, 0)),       # bias, VMEM-resident
        ],
        out_specs=pl.BlockSpec((tile_pm, pout), lambda i: (i, 0)),
        compiler_params=pltpu.CompilerParams(
            dimension_semantics=("parallel",),               # megacore on v7x
            vmem_limit_bytes=_vmem_limit_bytes(),            # generation-dependent
        ),
        cost_estimate=cost,
    )(x_packed, w, b2d)


# --------------------------- SpectralWrapper ---------------------------------
class SpectralWrapperPallas:
    """JAX/Pallas port of SpectralWrapper.

    models: list of (model_id, n_channels, W[n_channels, out_i], b[out_i])
    applied to consecutive spectral slices of the last axis; per-model outputs
    are concatenated along the last axis.  Realized as a single lane-packed,
    replicated block-diagonal dense + ReLU so the whole forward is one kernel.
    """

    def __init__(self, models, out_channels=False, out_dtype=None, tile_pm=2048):
        self.return_out_channels = out_channels
        self.out_dtype = out_dtype           # None -> follow x.dtype
        self.tile_pm = tile_pm
        self.model_ids = [mid for (mid, _, _, _) in models]
        self.n_channels = [nch for (_, nch, _, _) in models]
        self.out_sizes = [int(W.shape[1]) for (_, _, W, _) in models]
        self.c_total = int(sum(self.n_channels))
        self.out_total = int(sum(self.out_sizes))

        # Fused block-diagonal weight / bias over all sub-models (off-diagonal
        # blocks are exact zeros, so spectral channels cannot leak).
        w_fused = jnp.zeros((self.c_total, self.out_total), jnp.float32)
        b_fused = jnp.zeros((self.out_total,), jnp.float32)
        r, col = 0, 0
        for (_, nch, W, b) in models:
            no = W.shape[1]
            w_fused = w_fused.at[r:r + nch, col:col + no].set(W.astype(jnp.float32))
            b_fused = b_fused.at[col:col + no].set(b.astype(jnp.float32))
            r += nch
            col += no

        # Lane packing: P rows folded into lanes; replicate the fused block
        # diagonal P times so (P*C, P*OUT) are lane-dense (multiples of 128).
        self.pack = _pick_pack_factor(self.c_total, self.out_total)
        eye = jnp.eye(self.pack, dtype=jnp.float32)
        self.w_packed_f32 = jnp.kron(eye, w_fused)                   # (P*C, P*OUT)
        self.b_packed2d = jnp.tile(b_fused, self.pack).reshape(1, -1)  # (1, P*OUT)
        self._w_cache = {}

    def _weight_for(self, dtype):
        key = jnp.dtype(dtype).name
        if key not in self._w_cache:
            self._w_cache[key] = self.w_packed_f32.astype(dtype)
        return self._w_cache[key]

    def __call__(self, x):
        # x: (N, L, C_total)
        n, l, c = x.shape
        assert c == self.c_total, (c, self.c_total)
        p = self.pack
        m = n * l
        x2d = x.reshape(m, c)                       # free row-major reshape

        m_pad = _round_up(m, p)
        if m_pad != m:
            # TODO(synk): this tail pad costs one extra pass over x; it is only
            # taken when N*L is not a multiple of the pack factor P.
            x2d = jnp.pad(x2d, ((0, m_pad - m), (0, 0)))

        x_packed = x2d.reshape(m_pad // p, p * c)   # free row-major reshape
        out_dtype = self.out_dtype or x.dtype
        w = self._weight_for(x.dtype)               # tiny (~0.4 MB), cached

        y_packed = fused_dense_relu_pallas(
            x_packed, w, self.b_packed2d, out_dtype=out_dtype, tile_pm=self.tile_pm)

        y2d = y_packed.reshape(m_pad, self.out_total)   # free reshape
        if m_pad != m:
            y2d = y2d[:m]
        out = y2d.reshape(n, l, self.out_total)
        if self.return_out_channels:
            return out, list(self.out_sizes)
        return out


# ------------------------------- reference ----------------------------------
def reference_forward(models, x):
    outs, B = [], 0
    for (_, n_ch, W, b) in models:
        xs = x[:, :, B:B + n_ch]
        y = jnp.maximum(jnp.einsum("nlk,ko->nlo", xs, W) + b, 0.0)
        outs.append(y)
        B += n_ch
    return jnp.concatenate(outs, axis=-1)


# --------------------------------- main --------------------------------------
if __name__ == "__main__":
    key = jax.random.PRNGKey(0)
    k_x, k_w1, k_b1, k_w2, k_b2, k_x2, k_x3, k_x4 = jax.random.split(key, 8)

    # Two spectral-domain sub-models: 6 + 10 = 16 total spectral channels.
    NCH_A, OUT_A = 6, 8
    NCH_B, OUT_B = 10, 16

    models = [
        ("vis", NCH_A,
         jax.random.normal(k_w1, (NCH_A, OUT_A), jnp.float32) * 0.2,
         jax.random.normal(k_b1, (OUT_A,), jnp.float32) * 0.1),
        ("swir", NCH_B,
         jax.random.normal(k_w2, (NCH_B, OUT_B), jnp.float32) * 0.2,
         jax.random.normal(k_b2, (OUT_B,), jnp.float32) * 0.1),
    ]

    wrapper = SpectralWrapperPallas(models, out_channels=True)
    wrapper_plain = SpectralWrapperPallas(models, out_channels=False)

    # --- small shape, f32, single packed block --------------------------------
    x = jax.random.normal(k_x, (2, 8, NCH_A + NCH_B), jnp.float32)
    out, out_channels = wrapper(x)
    out = jax.block_until_ready(out)
    ref = reference_forward(models, x)
    assert out.shape == (2, 8, OUT_A + OUT_B), out.shape
    assert out_channels == [OUT_A, OUT_B], out_channels
    assert jnp.allclose(out, ref, atol=1e-4, rtol=1e-4), "f32 mismatch vs reference"

    # --- multi-block grid with a ragged last block (no wrapper-side tile pad) --
    x_big = jax.random.normal(k_x2, (4, 600, NCH_A + NCH_B), jnp.float32)
    out_big = jax.block_until_ready(wrapper(x_big)[0])
    ref_big = reference_forward(models, x_big)
    assert out_big.shape == (4, 600, OUT_A + OUT_B), out_big.shape
    assert jnp.allclose(out_big, ref_big, atol=1e-4, rtol=1e-4), "tiled mismatch"

    # --- row count not a multiple of the pack factor (exercises the P-pad path)
    x_odd = jax.random.normal(k_x3, (3, 50, NCH_A + NCH_B), jnp.float32)
    out_odd = jax.block_until_ready(wrapper_plain(x_odd))
    ref_odd = reference_forward(models, x_odd)
    assert out_odd.shape == (3, 50, OUT_A + OUT_B), out_odd.shape
    assert jnp.allclose(out_odd, ref_odd, atol=1e-4, rtol=1e-4), "odd-M mismatch"

    # --- producer already hands bf16: bf16 read AND bf16 write, no extra cast --
    x_bf16 = jax.random.normal(k_x4, (2, 128, NCH_A + NCH_B), jnp.float32)
    x_bf16 = x_bf16.astype(jnp.bfloat16)   # simulates an upstream bf16 producer
    out_bf16 = jax.block_until_ready(wrapper_plain(x_bf16))
    ref_bf16 = reference_forward(models, x_bf16.astype(jnp.float32))
    assert out_bf16.dtype == jnp.bfloat16, out_bf16.dtype
    assert jnp.allclose(out_bf16.astype(jnp.float32), ref_bf16,
                        atol=5e-2, rtol=5e-2), "bf16 mismatch vs reference"

    print("KERNEL_OK")
</pallas_src>

<mosaic_0001>
module attributes {stable_mosaic.version = 11 : i64} {
  func.func @_fused_dense_relu_kernel(%arg0: i32, %arg1: memref<1x256xf32, #tpu.memory_space<vmem>>, %arg2: memref<256x384xf32, #tpu.memory_space<vmem>>, %arg3: memref<1x384xf32, #tpu.memory_space<vmem>>, %arg4: memref<1x384xf32, #tpu.memory_space<vmem>>) attributes {dimension_semantics = [#tpu.dimension_semantics<parallel>], iteration_bounds = array<i64: 1>, scalar_prefetch = 0 : i64, scratch_operands = 0 : i64, tpu.core_type = #tpu.core_type<tc>, window_params = [{transform_indices = @transform_0, window_bounds = array<i64: 1, 256>}, {pipeline_mode = #tpu.pipeline_mode<synchronous>, transform_indices = @transform_1, window_bounds = array<i64: 256, 384>}, {pipeline_mode = #tpu.pipeline_mode<synchronous>, transform_indices = @transform_2, window_bounds = array<i64: 1, 384>}, {transform_indices = @transform_3, window_bounds = array<i64: 1, 384>}]} {
    %c0 = arith.constant 0 : index
    %c0_0 = arith.constant 0 : index
    %0 = vector.load %arg1[%c0, %c0_0] : memref<1x256xf32, #tpu.memory_space<vmem>>, vector<1x256xf32>
    %c0_1 = arith.constant 0 : index
    %c0_2 = arith.constant 0 : index
    %1 = vector.load %arg2[%c0_1, %c0_2] : memref<256x384xf32, #tpu.memory_space<vmem>>, vector<256x384xf32>
    %cst = arith.constant dense<0.000000e+00> : vector<1x384xf32>
    %2 = tpu.matmul %0, %1, %cst {dimension_numbers = #tpu.dot_dimension_numbers<[1], [0], [0], [1], [0, 0, 1, 1], [], []>} : vector<1x256xf32>, vector<256x384xf32>, vector<1x384xf32> -> vector<1x384xf32>
    %c0_3 = arith.constant 0 : index
    %c0_4 = arith.constant 0 : index
    %3 = vector.load %arg3[%c0_3, %c0_4] : memref<1x384xf32, #tpu.memory_space<vmem>>, vector<1x384xf32>
    %4 = arith.addf %2, %3 : vector<1x384xf32>
    %cst_5 = arith.constant 0.000000e+00 : f32
    %5 = vector.broadcast %cst_5 : f32 to vector<1x384xf32>
    %6 = arith.maximumf %4, %5 : vector<1x384xf32>
    %c0_6 = arith.constant 0 : index
    %c0_7 = arith.constant 0 : index
    %7 = vector.load %arg4[%c0_6, %c0_7] : memref<1x384xf32, #tpu.memory_space<vmem>>, vector<1x384xf32>
    tpu.vector_store %arg4[%c0_6, %c0_7], %6 {strides = array<i32>} : memref<1x384xf32, #tpu.memory_space<vmem>>, vector<1x384xf32>,
    return
  }
  func.func @transform_0(%arg0: i32) -> (i32, i32) {
    %c0_i32 = arith.constant 0 : i32
    %c0_i32_0 = arith.constant 0 : i32
    return %arg0, %c0_i32 : i32, i32
  }
  func.func @transform_1(%arg0: i32) -> (i32, i32) {
    %c0_i32 = arith.constant 0 : i32
    %c0_i32_0 = arith.constant 0 : i32
    %c0_i32_1 = arith.constant 0 : i32
    return %c0_i32, %c0_i32_0 : i32, i32
  }
  func.func @transform_2(%arg0: i32) -> (i32, i32) {
    %c0_i32 = arith.constant 0 : i32
    %c0_i32_0 = arith.constant 0 : i32
    %c0_i32_1 = arith.constant 0 : i32
    return %c0_i32, %c0_i32_0 : i32, i32
  }
  func.func @transform_3(%arg0: i32) -> (i32, i32) {
    %c0_i32 = arith.constant 0 : i32
    %c0_i32_0 = arith.constant 0 : i32
    return %arg0, %c0_i32 : i32, i32
  }
}

</mosaic_0001>

<llo_original>
// kernel: tpu_custom_call.1
$region0: #{tpu_custom_call.1}
  #allocation0 [shape = 'u32[]', space=smem, size = 0x4, offset = 0x4, fixed_abs, tag = 'smem constant byte address 0x4 - core index']
  #allocation1 [shape = 'u32[144,128]{1,0:T(1,128)}', space=vmem, size = 0x12000, scoped, tag = 'internal scratch']
  %s0 = inlined_call_operand.hbm [shape: f32[1,256], index: 0, kind: input, shape index: {}]
  %s1 = inlined_call_operand.hbm [shape: f32[256,384], index: 1, kind: input, shape index: {}]
  %s2 = inlined_call_operand.vmem [shape: f32[1,384], index: 2, kind: input, shape index: {}]
  %s3 = inlined_call_operand.hbm [shape: f32[1,384], index: 3, kind: output, shape index: {}]
  %s4 = sld [smem:[#allocation0]]
  $region30: #{tpu_custom_call.1} parent=0
    _
  %s6 = ssub.s32 1, %s4
  %s7 = scalar_select 0, %s6, %s4
  $region1: #{tpu_custom_call.1} parent=0
    #allocation2 [shape = 'u8[1024]{0}', space=vmem, size = 0x400, scoped, tag = 'input window, operand 0, single buffered']
    #allocation3 [shape = 's32[1]{0}', space=sflag, size = 0x4, scoped, tag = 'scoped memory for tpu_custom_call.1']
    #allocation4 [shape = 's32[1]{0}', space=sflag, size = 0x4, scoped, tag = 'scoped memory for tpu_custom_call.1']
    #allocation5 [shape = 'u8[393216]{0}', space=vmem, size = 0x60000, scoped, tag = 'input window, operand 1, single buffered']
    #allocation6 [shape = 's32[1]{0}', space=sflag, size = 0x4, scoped, tag = 'scoped memory for tpu_custom_call.1']
    #allocation7 [shape = 'u8[1536]{0}', space=vmem, size = 0x800, scoped, tag = 'output window, operand 0, single buffered']
    %8 = vsyncpa [#allocation3], 0
    %9 = vsyncpa [#allocation6], 0
    %10 = vsyncpa [#allocation4], 0
    // Predicated region
    $region2: #{tpu_custom_call.1} parent=1 // pred_check
      _
    $region3: #{tpu_custom_call.1} parent=1 // pred_check_branch
      %12 = sbr.rel (0) target = $region5
    $region4: #{tpu_custom_call.1} parent=1 // pred_region
      %s14 = ssub.s32 32, 32
      %15 = vsyncadd [#allocation3], %s14
      %s17 = sshll.u32 [#allocation2], 4
      %s18 = int_to_ptr.vmem [resolvable:$true] %s17
      %20 = dma.hbm_to_vmem [thread:$0]  %s0, 32, %s18, [#allocation3]
    $region5: #{tpu_custom_call.1} parent=1 // pred_fallthru
      _
    // Predicated region
    $region6: #{tpu_custom_call.1} parent=1 // pred_check
      _
    $region7: #{tpu_custom_call.1} parent=1 // pred_check_branch
      %22 = sbr.rel (0) target = $region9
    $region8: #{tpu_custom_call.1} parent=1 // pred_region
      %s24 = ssub.s32 12288, 12288
      %25 = vsyncadd [#allocation6], %s24
      %s26 = sshll.u32 [#allocation5], 4
      %s27 = int_to_ptr.vmem [resolvable:$true] %s26
      %32 = dma.hbm_to_vmem [thread:$0]  %s1, 12288, %s27, [#allocation6], 384, 384, 24
    $region9: #{tpu_custom_call.1} parent=1 // pred_fallthru
      _
    // Predicated region
    $region10: #{tpu_custom_call.1} parent=1 // pred_check
      _
    $region11: #{tpu_custom_call.1} parent=1 // pred_check_branch
      %34 = sbr.rel (0) target = $region13
    $region12: #{tpu_custom_call.1} parent=1 // pred_region
      _
    $region13: #{tpu_custom_call.1} parent=1 // pred_fallthru
      _
    // Predicated region
    $region14: #{tpu_custom_call.1} parent=1 // pred_check
      _
    $region15: #{tpu_custom_call.1} parent=1 // pred_check_branch
      %36 = sbr.rel (0) target = $region17
    $region16: #{tpu_custom_call.1} parent=1 // pred_region
      %37 = dma.done [#allocation3], 32
    $region17: #{tpu_custom_call.1} parent=1 // pred_fallthru
      _
    // Predicated region
    $region18: #{tpu_custom_call.1} parent=1 // pred_check
      _
    $region19: #{tpu_custom_call.1} parent=1 // pred_check_branch
      %39 = sbr.rel (0) target = $region21
    $region20: #{tpu_custom_call.1} parent=1 // pred_region
      %40 = dma.done [#allocation6], 12288
    $region21: #{tpu_custom_call.1} parent=1 // pred_fallthru
      _
    %v41 = vld [vmem:[#allocation2] sm:$0x3]
    %v42 = vld [vmem:[#allocation5] sm:$0xff]
    %v43 = vld [vmem:[#allocation5 + $0x8] sm:$0xff]
    %v44 = vld [vmem:[#allocation5 + $0x10] sm:$0xff]
    %v45 = vld [vmem:[#allocation5 + $0x18] sm:$0xff]
    %v46 = vld [vmem:[#allocation5 + $0x20] sm:$0xff]
    %v47 = vld [vmem:[#allocation5 + $0x28] sm:$0xff]
    %v48 = vld [vmem:[#allocation5 + $0x30] sm:$0xff]
    %v49 = vld [vmem:[#allocation5 + $0x38] sm:$0xff]
    %v50 = vld [vmem:[#allocation5 + $0x40] sm:$0xff]
    %v51 = vld [vmem:[#allocation5 + $0x48] sm:$0xff]
    %v52 = vld [vmem:[#allocation5 + $0x50] sm:$0xff]
    %v53 = vld [vmem:[#allocation5 + $0x58] sm:$0xff]
    %v54 = vld [vmem:[#allocation5 + $0x60] sm:$0xff]
    %v55 = vld [vmem:[#allocation5 + $0x68] sm:$0xff]
    %v56 = vld [vmem:[#allocation5 + $0x70] sm:$0xff]
    %v57 = vld [vmem:[#allocation5 + $0x78] sm:$0xff]
    %v58 = vld [vmem:[#allocation5 + $0x80] sm:$0xff]
    %v59 = vld [vmem:[#allocation5 + $0x88] sm:$0xff]
    %v60 = vld [vmem:[#allocation5 + $0x90] sm:$0xff]
    %v61 = vld [vmem:[#allocation5 + $0x98] sm:$0xff]
    %v62 = vld [vmem:[#allocation5 + $0xa0] sm:$0xff]
    %v63 = vld [vmem:[#allocation5 + $0xa8] sm:$0xff]
    %v64 = vld [vmem:[#allocation5 + $0xb0] sm:$0xff]
    %v65 = vld [vmem:[#allocation5 + $0xb8] sm:$0xff]
    %v66 = vld [vmem:[#allocation5 + $0xc0] sm:$0xff]
    %v67 = vld [vmem:[#allocation5 + $0xc8] sm:$0xff]
    %v68 = vld [vmem:[#allocation5 + $0xd0] sm:$0xff]
    %v69 = vld [vmem:[#allocation5 + $0xd8] sm:$0xff]
    %v70 = vld [vmem:[#allocation5 + $0xe0] sm:$0xff]
    %v71 = vld [vmem:[#allocation5 + $0xe8] sm:$0xff]
    %v72 = vld [vmem:[#allocation5 + $0xf0] sm:$0xff]
    %v73 = vld [vmem:[#allocation5 + $0xf8] sm:$0xff]
    %v74 = vld [vmem:[#allocation5 + $0x100] sm:$0xff]
    %v75 = vld [vmem:[#allocation5 + $0x108] sm:$0xff]
    %v76 = vld [vmem:[#allocation5 + $0x110] sm:$0xff]
    %v77 = vld [vmem:[#allocation5 + $0x118] sm:$0xff]
    %v78 = vld [vmem:[#allocation5 + $0x120] sm:$0xff]
    %v79 = vld [vmem:[#allocation5 + $0x128] sm:$0xff]
    %v80 = vld [vmem:[#allocation5 + $0x130] sm:$0xff]
    %v81 = vld [vmem:[#allocation5 + $0x138] sm:$0xff]
    %v82 = vld [vmem:[#allocation5 + $0x140] sm:$0xff]
    %v83 = vld [vmem:[#allocation5 + $0x148] sm:$0xff]
    %v84 = vld [vmem:[#allocation5 + $0x150] sm:$0xff]
    %v85 = vld [vmem:[#allocation5 + $0x158] sm:$0xff]
    %v86 = vld [vmem:[#allocation5 + $0x160] sm:$0xff]
    %v87 = vld [vmem:[#allocation5 + $0x168] sm:$0xff]
    %v88 = vld [vmem:[#allocation5 + $0x170] sm:$0xff]
    %v89 = vld [vmem:[#allocation5 + $0x178] sm:$0xff]
    %v90 = vld [vmem:[#allocation5 + $0x180] sm:$0xff]
    %v91 = vld [vmem:[#allocation5 + $0x188] sm:$0xff]
    %v92 = vld [vmem:[#allocation5 + $0x190] sm:$0xff]
    %v93 = vld [vmem:[#allocation5 + $0x198] sm:$0xff]
    %v94 = vld [vmem:[#allocation5 + $0x1a0] sm:$0xff]
    %v95 = vld [vmem:[#allocation5 + $0x1a8] sm:$0xff]
    %v96 = vld [vmem:[#allocation5 + $0x1b0] sm:$0xff]
    %v97 = vld [vmem:[#allocation5 + $0x1b8] sm:$0xff]
    %v98 = vld [vmem:[#allocation5 + $0x1c0] sm:$0xff]
    %v99 = vld [vmem:[#allocation5 + $0x1c8] sm:$0xff]
    %v100 = vld [vmem:[#allocation5 + $0x1d0] sm:$0xff]
    %v101 = vld [vmem:[#allocation5 + $0x1d8] sm:$0xff]
    %v102 = vld [vmem:[#allocation5 + $0x1e0] sm:$0xff]
    %v103 = vld [vmem:[#allocation5 + $0x1e8] sm:$0xff]
    %v104 = vld [vmem:[#allocation5 + $0x1f0] sm:$0xff]
    %v105 = vld [vmem:[#allocation5 + $0x1f8] sm:$0xff]
    %v106 = vld [vmem:[#allocation5 + $0x200] sm:$0xff]
    %v107 = vld [vmem:[#allocation5 + $0x208] sm:$0xff]
    %v108 = vld [vmem:[#allocation5 + $0x210] sm:$0xff]
    %v109 = vld [vmem:[#allocation5 + $0x218] sm:$0xff]
    %v110 = vld [vmem:[#allocation5 + $0x220] sm:$0xff]
    %v111 = vld [vmem:[#allocation5 + $0x228] sm:$0xff]
    %v112 = vld [vmem:[#allocation5 + $0x230] sm:$0xff]
    %v113 = vld [vmem:[#allocation5 + $0x238] sm:$0xff]
    %v114 = vld [vmem:[#allocation5 + $0x240] sm:$0xff]
    %v115 = vld [vmem:[#allocation5 + $0x248] sm:$0xff]
    %v116 = vld [vmem:[#allocation5 + $0x250] sm:$0xff]
    %v117 = vld [vmem:[#allocation5 + $0x258] sm:$0xff]
    %v118 = vld [vmem:[#allocation5 + $0x260] sm:$0xff]
    %v119 = vld [vmem:[#allocation5 + $0x268] sm:$0xff]
    %v120 = vld [vmem:[#allocation5 + $0x270] sm:$0xff]
    %v121 = vld [vmem:[#allocation5 + $0x278] sm:$0xff]
    %v122 = vld [vmem:[#allocation5 + $0x280] sm:$0xff]
    %v123 = vld [vmem:[#allocation5 + $0x288] sm:$0xff]
    %v124 = vld [vmem:[#allocation5 + $0x290] sm:$0xff]
    %v125 = vld [vmem:[#allocation5 + $0x298] sm:$0xff]
    %v126 = vld [vmem:[#allocation5 + $0x2a0] sm:$0xff]
    %v127 = vld [vmem:[#allocation5 + $0x2a8] sm:$0xff]
    %v128 = vld [vmem:[#allocation5 + $0x2b0] sm:$0xff]
    %v129 = vld [vmem:[#allocation5 + $0x2b8] sm:$0xff]
    %v130 = vld [vmem:[#allocation5 + $0x2c0] sm:$0xff]
    %v131 = vld [vmem:[#allocation5 + $0x2c8] sm:$0xff]
    %v132 = vld [vmem:[#allocation5 + $0x2d0] sm:$0xff]
    %v133 = vld [vmem:[#allocation5 + $0x2d8] sm:$0xff]
    %v134 = vld [vmem:[#allocation5 + $0x2e0] sm:$0xff]
    %v135 = vld [vmem:[#allocation5 + $0x2e8] sm:$0xff]
    %v136 = vld [vmem:[#allocation5 + $0x2f0] sm:$0xff]
    %v137 = vld [vmem:[#allocation5 + $0x2f8] sm:$0xff]
    %v138 = vld [vmem:[%s2] sm:$0x7]
    %v140 = vlaneseq
    %v141 = vshrl.u32 %v140, 7
    %v142 = vsub.s32 0, %v141
    %v143 = vrot.slane %v41, %v142
    %v144 = vlaneseq
    %v145 = vshrl.u32 %v144, 7
    %v146 = vsub.s32 1, %v145
    %v147 = vrot.slane %v41, %v146
    %v151 = vlaneseq
    %v152 = vshrl.u32 %v151, 7
    %v153 = vsub.s32 0, %v152
    %v154 = vrot.slane %v138, %v153
    %v155 = vlaneseq
    %v156 = vshrl.u32 %v155, 7
    %v157 = vsub.s32 1, %v156
    %v158 = vrot.slane %v138, %v157
    %v159 = vlaneseq
    %v160 = vshrl.u32 %v159, 7
    %v161 = vsub.s32 2, %v160
    %v162 = vrot.slane %v138, %v161
    %166 = vmatprep.subr.mxu0 %v43
    %167 = vmatpush1.msra.mxu0 %v42
    %168 = vmatprep.subr.mxu0 %v46
    %169 = vmatpush1.msra.mxu0 %v45
    %170 = vmatprep.subr.mxu0 %v49
    %171 = vmatpush1.msra.mxu0 %v48
    %172 = vmatprep.subr.mxu0 %v52
    %173 = vmatpush1.msra.mxu0 %v51
    %174 = vmatprep.subr.mxu0 %v55
    %175 = vmatpush1.msra.mxu0 %v54
    %176 = vmatprep.subr.mxu0 %v58
    %177 = vmatpush1.msra.mxu0 %v57
    %178 = vmatprep.subr.mxu0 %v61
    %179 = vmatpush1.msra.mxu0 %v60
    %180 = vmatprep.subr.mxu0 %v64
    %181 = vmatpush1.msra.mxu0 %v63
    %182 = vmatprep.subr.mxu0 %v67
    %183 = vmatpush1.msra.mxu0 %v66
    %184 = vmatprep.subr.mxu0 %v70
    %185 = vmatpush1.msra.mxu0 %v69
    %186 = vmatprep.subr.mxu0 %v73
    %187 = vmatpush1.msra.mxu0 %v72
    %188 = vmatprep.subr.mxu0 %v76
    %189 = vmatpush1.msra.mxu0 %v75
    %190 = vmatprep.subr.mxu0 %v79
    %191 = vmatpush1.msra.mxu0 %v78
    %192 = vmatprep.subr.mxu0 %v82
    %193 = vmatpush1.msra.mxu0 %v81
    %194 = vmatprep.subr.mxu0 %v85
    %195 = vmatpush1.msra.mxu0 %v84
    %196 = vmatprep.subr.mxu0 %v88
    %197 = vmatpush1.msra.mxu0 %v87
    %198 = vmatprep.subr.mxu0 %v91
    %199 = vmatpush1.msra.mxu0 %v90
    %200 = vmatprep.subr.mxu0 %v94
    %201 = vmatpush1.msra.mxu0 %v93
    %202 = vmatprep.subr.mxu0 %v97
    %203 = vmatpush1.msra.mxu0 %v96
    %204 = vmatprep.subr.mxu0 %v100
    %205 = vmatpush1.msra.mxu0 %v99
    %206 = vmatprep.subr.mxu0 %v103
    %207 = vmatpush1.msra.mxu0 %v102
    %208 = vmatprep.subr.mxu0 %v106
    %209 = vmatpush1.msra.mxu0 %v105
    %210 = vmatprep.subr.mxu0 %v109
    %211 = vmatpush1.msra.mxu0 %v108
    %212 = vmatprep.subr.mxu0 %v112
    %213 = vmatpush1.msra.mxu0 %v111
    %214 = vmatprep.subr.mxu0 %v115
    %215 = vmatpush1.msra.mxu0 %v114
    %216 = vmatprep.subr.mxu0 %v118
    %217 = vmatpush1.msra.mxu0 %v117
    %218 = vmatprep.subr.mxu0 %v121
    %219 = vmatpush1.msra.mxu0 %v120
    %220 = vmatprep.subr.mxu0 %v124
    %221 = vmatpush1.msra.mxu0 %v123
    %222 = vmatprep.subr.mxu0 %v127
    %223 = vmatpush1.msra.mxu0 %v126
    %224 = vmatprep.subr.mxu0 %v130
    %225 = vmatpush1.msra.mxu0 %v129
    %226 = vmatprep.subr.mxu0 %v133
    %227 = vmatpush1.msra.mxu0 %v132
    %228 = vmatprep.subr.mxu0 %v136
    %229 = vmatpush1.msra.mxu0 %v135
    %230 = vmatprep.mubr.f32.mxu0 %v147
    %231 = vmatmul.mubr.f32.gmra.mrb[0].mxu0 %v143
    %v232 = vpop.f32.mrb[0].mxu0
    %v233 = vadd.f32 %v154, %v232
    %v234 = vpop.f32.mrb[0].mxu0
    %v235 = vadd.f32 %v158, %v234
    %236 = vdwg.mxu0
    %237 = vmatprep.subr.mxu0 0.0
    %238 = vmatpush1.msra.mxu0 %v44
    %239 = vmatprep.subr.mxu0 0.0
    %240 = vmatpush1.msra.mxu0 %v47
    %241 = vmatprep.subr.mxu0 0.0
    %242 = vmatpush1.msra.mxu0 %v50
    %243 = vmatprep.subr.mxu0 0.0
    %244 = vmatpush1.msra.mxu0 %v53
    %245 = vmatprep.subr.mxu0 0.0
    %246 = vmatpush1.msra.mxu0 %v56
    %247 = vmatprep.subr.mxu0 0.0
    %248 = vmatpush1.msra.mxu0 %v59
    %249 = vmatprep.subr.mxu0 0.0
    %250 = vmatpush1.msra.mxu0 %v62
    %251 = vmatprep.subr.mxu0 0.0
    %252 = vmatpush1.msra.mxu0 %v65
    %253 = vmatprep.subr.mxu0 0.0
    %254 = vmatpush1.msra.mxu0 %v68
    %255 = vmatprep.subr.mxu0 0.0
    %256 = vmatpush1.msra.mxu0 %v71
    %257 = vmatprep.subr.mxu0 0.0
    %258 = vmatpush1.msra.mxu0 %v74
    %259 = vmatprep.subr.mxu0 0.0
    %260 = vmatpush1.msra.mxu0 %v77
    %261 = vmatprep.subr.mxu0 0.0
    %262 = vmatpush1.msra.mxu0 %v80
    %263 = vmatprep.subr.mxu0 0.0
    %264 = vmatpush1.msra.mxu0 %v83
    %265 = vmatprep.subr.mxu0 0.0
    %266 = vmatpush1.msra.mxu0 %v86
    %267 = vmatprep.subr.mxu0 0.0
    %268 = vmatpush1.msra.mxu0 %v89
    %269 = vmatprep.subr.mxu0 0.0
    %270 = vmatpush1.msra.mxu0 %v92
    %271 = vmatprep.subr.mxu0 0.0
    %272 = vmatpush1.msra.mxu0 %v95
    %273 = vmatprep.subr.mxu0 0.0
    %274 = vmatpush1.msra.mxu0 %v98
    %275 = vmatprep.subr.mxu0 0.0
    %276 = vmatpush1.msra.mxu0 %v101
    %277 = vmatprep.subr.mxu0 0.0
    %278 = vmatpush1.msra.mxu0 %v104
    %279 = vmatprep.subr.mxu0 0.0
    %280 = vmatpush1.msra.mxu0 %v107
    %281 = vmatprep.subr.mxu0 0.0
    %282 = vmatpush1.msra.mxu0 %v110
    %283 = vmatprep.subr.mxu0 0.0
    %284 = vmatpush1.msra.mxu0 %v113
    %285 = vmatprep.subr.mxu0 0.0
    %286 = vmatpush1.msra.mxu0 %v116
    %287 = vmatprep.subr.mxu0 0.0
    %288 = vmatpush1.msra.mxu0 %v119
    %289 = vmatprep.subr.mxu0 0.0
    %290 = vmatpush1.msra.mxu0 %v122
    %291 = vmatprep.subr.mxu0 0.0
    %292 = vmatpush1.msra.mxu0 %v125
    %293 = vmatprep.subr.mxu0 0.0
    %294 = vmatpush1.msra.mxu0 %v128
    %295 = vmatprep.subr.mxu0 0.0
    %296 = vmatpush1.msra.mxu0 %v131
    %297 = vmatprep.subr.mxu0 0.0
    %298 = vmatpush1.msra.mxu0 %v134
    %299 = vmatprep.subr.mxu0 0.0
    %300 = vmatpush1.msra.mxu0 %v137
    %301 = vmatprep.mubr.f32.mxu0 %v147
    %302 = vmatmul.mubr.f32.gmra.mrb[0].mxu0 %v143
    %v303 = vpop.f32.mrb[0].mxu0
    %v304 = vadd.f32 %v162, %v303
    %v305 = vpop.f32.mrb[0].mxu0
    %306 = vdwg.mxu0
    %v307 = vmax.f32 %v233, 0.0
    %v308 = vmax.f32 %v235, 0.0
    %v309 = vmax.f32 %v304, 0.0
    %v313 = vcombine.low %v307, %v308
    %v315 = vunpack.c.l.s4 1966171168
    %v316 = vunpack.c.0.s8 %v315
    %v317 = vlaneseq
    %v318 = vshrl.u32 %v317, 7
    %v319 = vsub.s32 %v316, %v318
    %v320 = vrot.slane %v313, %v319
    %v322 = vunpack.c.l.s4 1966171168
    %v323 = vunpack.c.0.s8 %v322
    %v324 = vlaneseq
    %v325 = vshrl.u32 %v324, 7
    %v326 = vsub.s32 %v323, %v325
    %v327 = vrot.slane %v309, %v326
    %v328 = vcombine.low %v320, %v327
    %v330 = vunpack.c.l.s4 1966171168
    %v331 = vunpack.c.0.s8 %v330
    %v332 = vlaneseq
    %v333 = vshrl.u32 %v332, 7
    %v334 = vsub.s32 %v331, %v333
    %v335 = vrot.slane %v328, %v334
    %v337 = vlaneseq
    %vm338 = vcmp.ge.s32.totalorder %v337, 0
    %vm339 = vcmp.lt.s32.totalorder %v337, 384
    %vm340 = vmand %vm338, %vm339
    %341 = vst.msk [vmem:[#allocation7] sm:$0x7] %vm340, %v335
    // Predicated region
    $region22: #{tpu_custom_call.1} parent=1 // pred_check
      _
    $region23: #{tpu_custom_call.1} parent=1 // pred_check_branch
      %343 = sbr.rel (0) target = $region25
    $region24: #{tpu_custom_call.1} parent=1 // pred_region
      %s345 = ssub.s32 48, 48
      %346 = vsyncadd [#allocation4], %s345
      %s348 = sshll.u32 [#allocation7], 4
      %s349 = int_to_ptr.vmem [resolvable:$true] %s348
      %351 = dma.vmem_to_hbm [thread:$0]  %s349, 48, %s3, [#allocation4]
    $region25: #{tpu_custom_call.1} parent=1 // pred_fallthru
      _
    // Predicated region
    $region26: #{tpu_custom_call.1} parent=1 // pred_check
      _
    $region27: #{tpu_custom_call.1} parent=1 // pred_check_branch
      %353 = sbr.rel (0) target = $region29
    $region28: #{tpu_custom_call.1} parent=1 // pred_region
      %354 = dma.done [#allocation4], 48
    $region29: #{tpu_custom_call.1} parent=1 // pred_fallthru
      _
    %355 = vsyncpa [#allocation3], 1
    %356 = vsyncpa [#allocation6], 1
    %357 = vsyncpa [#allocation4], 1

</llo_original>
